<compile_context>
chip_gen: v7x
topology: tpu7x:2x2x1
jax: 0.10.0
libtpu: 0.0.40
codegen_flags: <defaults>
</compile_context>

<pallas_src>
import jax
import jax.numpy as jnp
from jax.experimental import pallas as pl
from jax.experimental.pallas import tpu as pltpu

LANE = 128  # TPU lane width


def mlp_kernel(x_ref, w1_ref, b1_ref, w2_ref, b2_ref, w3_ref, b3_ref, o_ref):
    # fc1 + ReLU  (dropout1 is identity in eval mode)
    h1 = jnp.dot(x_ref[...], w1_ref[...], preferred_element_type=jnp.float32)
    h1 = jnp.maximum(h1 + b1_ref[...], 0.0).astype(w2_ref.dtype)
    # fc2 + ReLU  (dropout2 is identity in eval mode; zero-padded lanes stay 0)
    h2 = jnp.dot(h1, w2_ref[...], preferred_element_type=jnp.float32)
    h2 = jnp.maximum(h2 + b2_ref[...], 0.0).astype(w3_ref.dtype)
    # fc3 (logits, lane-padded to 128 columns -> unmasked full-lane stores)
    o_ref[...] = (
        jnp.dot(h2, w3_ref[...], preferred_element_type=jnp.float32) + b3_ref[...]
    ).astype(o_ref.dtype)


def _pad_to(arr, shape):
    pads = [(0, t - s) for s, t in zip(arr.shape, shape)]
    if all(p == (0, 0) for p in pads):
        return arr
    return jnp.pad(arr, pads)


def _round_up(n, m):
    return ((n + m - 1) // m) * m


def neural_network_forward(x, params, *, batch_tile=256,
                           compute_dtype=jnp.bfloat16):
    """Forward pass of the 3-layer MLP as a single fused Pallas kernel.

    x: (B, input_dim) float32
    params: dict with w1 (D,128), b1 (128,), w2 (128,64), b2 (64,),
            w3 (64,8), b3 (8,)
    Returns (B, 8) float32 logits.
    """
    assert batch_tile % 8 == 0, "batch_tile must be a multiple of 8"

    w1, b1 = params["w1"], params["b1"]
    w2, b2 = params["w2"], params["b2"]
    w3, b3 = params["w3"], params["b3"]

    B, D = x.shape
    H1 = w1.shape[1]       # 128 (already lane-dense)
    H2 = w2.shape[1]       # 64
    NOUT = w3.shape[1]     # 8

    # Lane-dense widths for the hidden-2 and output paths.
    H2P = _round_up(H2, LANE)       # 128
    NOUTP = _round_up(NOUT, LANE)   # 128

    # Pad the batch up to a multiple of batch_tile (zero rows, sliced off below).
    BP = _round_up(B, batch_tile)
    xp = _pad_to(x, (BP, D)).astype(compute_dtype)

    # Zero-padded, bf16 weights. Zero columns/rows are arithmetically free on
    # the MXU and keep every intermediate / output block 128-lane dense.
    # NOTE: input_dim (K of fc1) is left as-is; with small D the first matmul
    # underfills the MXU contraction depth, but padding it would multiply the
    # x HBM read, which dominates at large batch.
    w1c = w1.astype(compute_dtype)                         # (D, 128)
    w2c = _pad_to(w2, (H1, H2P)).astype(compute_dtype)     # (128, 128)
    w3c = _pad_to(w3, (H2P, NOUTP)).astype(compute_dtype)  # (128, 128)
    b1r = b1.reshape(1, H1).astype(jnp.float32)
    b2r = _pad_to(b2.reshape(1, H2), (1, H2P)).astype(jnp.float32)
    b3r = _pad_to(b3.reshape(1, NOUT), (1, NOUTP)).astype(jnp.float32)

    grid = (BP // batch_tile,)

    out = pl.pallas_call(
        mlp_kernel,
        out_shape=jax.ShapeDtypeStruct((BP, NOUTP), jnp.float32),
        grid_spec=pltpu.PrefetchScalarGridSpec(
            num_scalar_prefetch=0,
            grid=grid,
            in_specs=[
                pl.BlockSpec((batch_tile, D), lambda i: (i, 0)),   # x tile
                pl.BlockSpec((D, H1), lambda i: (0, 0)),           # w1 (resident)
                pl.BlockSpec((1, H1), lambda i: (0, 0)),           # b1
                pl.BlockSpec((H1, H2P), lambda i: (0, 0)),         # w2
                pl.BlockSpec((1, H2P), lambda i: (0, 0)),          # b2
                pl.BlockSpec((H2P, NOUTP), lambda i: (0, 0)),      # w3
                pl.BlockSpec((1, NOUTP), lambda i: (0, 0)),        # b3
            ],
            out_specs=pl.BlockSpec((batch_tile, NOUTP), lambda i: (i, 0)),
        ),
        compiler_params=pltpu.CompilerParams(
            dimension_semantics=("parallel",),   # batch axis shards across TCs
            vmem_limit_bytes=32 * 1024 * 1024,   # explicit; actual use << this
        ),
    )(xp, w1c, b1r, w2c, b2r, w3c, b3r)

    # Strip batch padding and the zero-padded output lanes.
    return out[:B, :NOUT]


def init_params(key, input_dim):
    """Deterministic synthetic parameter init (matches PyTorch Linear shapes)."""
    ks = jax.random.split(key, 6)

    def linear(kw, kb, fan_in, fan_out):
        # Kaiming-uniform-ish bound like torch.nn.Linear default
        bound = 1.0 / jnp.sqrt(fan_in)
        w = jax.random.uniform(kw, (fan_in, fan_out), jnp.float32, -bound, bound)
        b = jax.random.uniform(kb, (fan_out,), jnp.float32, -bound, bound)
        return w, b

    w1, b1 = linear(ks[0], ks[1], input_dim, 128)
    w2, b2 = linear(ks[2], ks[3], 128, 64)
    w3, b3 = linear(ks[4], ks[5], 64, 8)
    return {"w1": w1, "b1": b1, "w2": w2, "b2": b2, "w3": w3, "b3": b3}


def reference_forward(x, p):
    h1 = jnp.maximum(x @ p["w1"] + p["b1"], 0.0)
    h2 = jnp.maximum(h1 @ p["w2"] + p["b2"], 0.0)
    return h2 @ p["w3"] + p["b3"]


if __name__ == "__main__":
    key = jax.random.PRNGKey(0)
    k_x, k_p = jax.random.split(key)

    batch, input_dim = 512, 32   # 2 grid steps at batch_tile=256
    x = jax.random.normal(k_x, (batch, input_dim), jnp.float32)
    params = init_params(k_p, input_dim)

    # TODO(synk): dropout layers are treated as identity (eval-mode semantics);
    # training-mode stochastic dropout is not implemented here.
    out = neural_network_forward(x, params, batch_tile=256)
    out = jax.block_until_ready(out)

    ref = reference_forward(x, params)
    assert out.shape == (batch, 8), out.shape
    # bf16 matmul inputs (f32 accumulation) -> loosened tolerance vs f32 ref.
    assert jnp.allclose(out, ref, atol=3e-2, rtol=3e-2), "mismatch vs reference"

    print("KERNEL_OK")
</pallas_src>

<mosaic_0001>
module attributes {stable_mosaic.version = 11 : i64} {
  func.func @mlp_kernel(%arg0: i32, %arg1: memref<256x32xbf16, #tpu.memory_space<vmem>>, %arg2: memref<32x128xbf16, #tpu.memory_space<vmem>>, %arg3: memref<1x128xf32, #tpu.memory_space<vmem>>, %arg4: memref<128x128xbf16, #tpu.memory_space<vmem>>, %arg5: memref<1x128xf32, #tpu.memory_space<vmem>>, %arg6: memref<128x128xbf16, #tpu.memory_space<vmem>>, %arg7: memref<1x128xf32, #tpu.memory_space<vmem>>, %arg8: memref<256x128xf32, #tpu.memory_space<vmem>>) attributes {dimension_semantics = [#tpu.dimension_semantics<parallel>], iteration_bounds = array<i64: 2>, scalar_prefetch = 0 : i64, scratch_operands = 0 : i64, tpu.core_type = #tpu.core_type<tc>, window_params = [{transform_indices = @transform_0, window_bounds = array<i64: 256, 32>}, {pipeline_mode = #tpu.pipeline_mode<synchronous>, transform_indices = @transform_1, window_bounds = array<i64: 32, 128>}, {pipeline_mode = #tpu.pipeline_mode<synchronous>, transform_indices = @transform_2, window_bounds = array<i64: 1, 128>}, {pipeline_mode = #tpu.pipeline_mode<synchronous>, transform_indices = @transform_3, window_bounds = array<i64: 128, 128>}, {pipeline_mode = #tpu.pipeline_mode<synchronous>, transform_indices = @transform_4, window_bounds = array<i64: 1, 128>}, {pipeline_mode = #tpu.pipeline_mode<synchronous>, transform_indices = @transform_5, window_bounds = array<i64: 128, 128>}, {pipeline_mode = #tpu.pipeline_mode<synchronous>, transform_indices = @transform_6, window_bounds = array<i64: 1, 128>}, {transform_indices = @transform_7, window_bounds = array<i64: 256, 128>}]} {
    %c0 = arith.constant 0 : index
    %c0_0 = arith.constant 0 : index
    %0 = vector.load %arg1[%c0, %c0_0] : memref<256x32xbf16, #tpu.memory_space<vmem>>, vector<256x32xbf16>
    %c0_1 = arith.constant 0 : index
    %c0_2 = arith.constant 0 : index
    %1 = vector.load %arg2[%c0_1, %c0_2] : memref<32x128xbf16, #tpu.memory_space<vmem>>, vector<32x128xbf16>
    %cst = arith.constant dense<0.000000e+00> : vector<256x128xf32>
    %2 = tpu.matmul %0, %1, %cst {dimension_numbers = #tpu.dot_dimension_numbers<[1], [0], [0], [1], [0, 0, 1, 1], [], []>} : vector<256x32xbf16>, vector<32x128xbf16>, vector<256x128xf32> -> vector<256x128xf32>
    %c0_3 = arith.constant 0 : index
    %c0_4 = arith.constant 0 : index
    %3 = vector.load %arg3[%c0_3, %c0_4] : memref<1x128xf32, #tpu.memory_space<vmem>>, vector<1x128xf32>
    %4 = vector.broadcast %3 : vector<1x128xf32> to vector<256x128xf32>
    %5 = arith.addf %2, %4 : vector<256x128xf32>
    %cst_5 = arith.constant 0.000000e+00 : f32
    %6 = vector.broadcast %cst_5 : f32 to vector<256x128xf32>
    %7 = arith.maximumf %5, %6 : vector<256x128xf32>
    %8 = arith.truncf %7 : vector<256x128xf32> to vector<256x128xbf16>
    %c0_6 = arith.constant 0 : index
    %c0_7 = arith.constant 0 : index
    %9 = vector.load %arg4[%c0_6, %c0_7] : memref<128x128xbf16, #tpu.memory_space<vmem>>, vector<128x128xbf16>
    %cst_8 = arith.constant dense<0.000000e+00> : vector<256x128xf32>
    %10 = tpu.matmul %8, %9, %cst_8 {dimension_numbers = #tpu.dot_dimension_numbers<[1], [0], [0], [1], [0, 0, 1, 1], [], []>} : vector<256x128xbf16>, vector<128x128xbf16>, vector<256x128xf32> -> vector<256x128xf32>
    %c0_9 = arith.constant 0 : index
    %c0_10 = arith.constant 0 : index
    %11 = vector.load %arg5[%c0_9, %c0_10] : memref<1x128xf32, #tpu.memory_space<vmem>>, vector<1x128xf32>
    %12 = vector.broadcast %11 : vector<1x128xf32> to vector<256x128xf32>
    %13 = arith.addf %10, %12 : vector<256x128xf32>
    %cst_11 = arith.constant 0.000000e+00 : f32
    %14 = vector.broadcast %cst_11 : f32 to vector<256x128xf32>
    %15 = arith.maximumf %13, %14 : vector<256x128xf32>
    %16 = arith.truncf %15 : vector<256x128xf32> to vector<256x128xbf16>
    %c0_12 = arith.constant 0 : index
    %c0_13 = arith.constant 0 : index
    %17 = vector.load %arg6[%c0_12, %c0_13] : memref<128x128xbf16, #tpu.memory_space<vmem>>, vector<128x128xbf16>
    %cst_14 = arith.constant dense<0.000000e+00> : vector<256x128xf32>
    %18 = tpu.matmul %16, %17, %cst_14 {dimension_numbers = #tpu.dot_dimension_numbers<[1], [0], [0], [1], [0, 0, 1, 1], [], []>} : vector<256x128xbf16>, vector<128x128xbf16>, vector<256x128xf32> -> vector<256x128xf32>
    %c0_15 = arith.constant 0 : index
    %c0_16 = arith.constant 0 : index
    %19 = vector.load %arg7[%c0_15, %c0_16] : memref<1x128xf32, #tpu.memory_space<vmem>>, vector<1x128xf32>
    %20 = vector.broadcast %19 : vector<1x128xf32> to vector<256x128xf32>
    %21 = arith.addf %18, %20 : vector<256x128xf32>
    %c0_17 = arith.constant 0 : index
    %c0_18 = arith.constant 0 : index
    %22 = vector.load %arg8[%c0_17, %c0_18] : memref<256x128xf32, #tpu.memory_space<vmem>>, vector<256x128xf32>
    tpu.vector_store %arg8[%c0_17, %c0_18], %21 {strides = array<i32>} : memref<256x128xf32, #tpu.memory_space<vmem>>, vector<256x128xf32>,
    return
  }
  func.func @transform_0(%arg0: i32) -> (i32, i32) {
    %c0_i32 = arith.constant 0 : i32
    %c0_i32_0 = arith.constant 0 : i32
    return %arg0, %c0_i32 : i32, i32
  }
  func.func @transform_1(%arg0: i32) -> (i32, i32) {
    %c0_i32 = arith.constant 0 : i32
    %c0_i32_0 = arith.constant 0 : i32
    %c0_i32_1 = arith.constant 0 : i32
    return %c0_i32, %c0_i32_0 : i32, i32
  }
  func.func @transform_2(%arg0: i32) -> (i32, i32) {
    %c0_i32 = arith.constant 0 : i32
    %c0_i32_0 = arith.constant 0 : i32
    %c0_i32_1 = arith.constant 0 : i32
    return %c0_i32, %c0_i32_0 : i32, i32
  }
  func.func @transform_3(%arg0: i32) -> (i32, i32) {
    %c0_i32 = arith.constant 0 : i32
    %c0_i32_0 = arith.constant 0 : i32
    %c0_i32_1 = arith.constant 0 : i32
    return %c0_i32, %c0_i32_0 : i32, i32
  }
  func.func @transform_4(%arg0: i32) -> (i32, i32) {
    %c0_i32 = arith.constant 0 : i32
    %c0_i32_0 = arith.constant 0 : i32
    %c0_i32_1 = arith.constant 0 : i32
    return %c0_i32, %c0_i32_0 : i32, i32
  }
  func.func @transform_5(%arg0: i32) -> (i32, i32) {
    %c0_i32 = arith.constant 0 : i32
    %c0_i32_0 = arith.constant 0 : i32
    %c0_i32_1 = arith.constant 0 : i32
    return %c0_i32, %c0_i32_0 : i32, i32
  }
  func.func @transform_6(%arg0: i32) -> (i32, i32) {
    %c0_i32 = arith.constant 0 : i32
    %c0_i32_0 = arith.constant 0 : i32
    %c0_i32_1 = arith.constant 0 : i32
    return %c0_i32, %c0_i32_0 : i32, i32
  }
  func.func @transform_7(%arg0: i32) -> (i32, i32) {
    %c0_i32 = arith.constant 0 : i32
    %c0_i32_0 = arith.constant 0 : i32
    return %arg0, %c0_i32 : i32, i32
  }
}

</mosaic_0001>

<llo_original>
// kernel: tpu_custom_call.1
$region0: #{tpu_custom_call.1}
  #allocation0 [shape = 'u32[]', space=smem, size = 0x4, offset = 0x4, fixed_abs, tag = 'smem constant byte address 0x4 - core index']
  #allocation1 [shape = 'u32[144,128]{1,0:T(1,128)}', space=vmem, size = 0x12000, scoped, tag = 'internal scratch']
  %s0 = inlined_call_operand.vmem [shape: bf16[512,32], index: 0, kind: input, shape index: {}]
  %s1 = inlined_call_operand.vmem [shape: bf16[32,128], index: 1, kind: input, shape index: {}]
  %s2 = inlined_call_operand.vmem [shape: f32[1,128], index: 2, kind: input, shape index: {}]
  %s3 = inlined_call_operand.vmem [shape: bf16[128,128], index: 3, kind: input, shape index: {}]
  %s4 = inlined_call_operand.vmem [shape: f32[1,128], index: 4, kind: input, shape index: {}]
  %s5 = inlined_call_operand.vmem [shape: bf16[128,128], index: 5, kind: input, shape index: {}]
  %s6 = inlined_call_operand.vmem [shape: f32[1,128], index: 6, kind: input, shape index: {}]
  %s7 = inlined_call_operand.hbm [shape: f32[512,128], index: 7, kind: output, shape index: {}]
  %s8 = sld [smem:[#allocation0]]
  $region61: #{tpu_custom_call.1} parent=0
    _
  %s10 = ssub.s32 1, %s8
  %s11 = scalar_select 0, %s10, %s8
  $region1: #{tpu_custom_call.1} parent=0
    #allocation2 [shape = 'u8[262144]{0}', space=vmem, size = 0x40000, scoped, tag = 'output window, operand 0']
    #allocation3 [shape = 's32[2]{0}', space=sflag, size = 0x8, scoped, tag = 'scoped memory for tpu_custom_call.1']
    %12 = vsyncpa [#allocation3], 0
    %s13 = scalar_lea.sflag [#allocation3], 1
    %14 = vsyncpa %s13, 0
    loop: start=0, step=1, limit=4
    $region2: #{tpu_custom_call.1} parent=1 // loop_pre_header
      _
    $region3: #{tpu_custom_call.1} parent=1 // loop_header
      %s16 = sphi 0, %s20
      %p17 = scmp.ge.s32.totalorder %s16, 4
      %s26 = sphi 0, %s28
      %s29 = sphi 0, %s26
      %s30 = sphi 0, %s29
      %s46 = sphi 0, %s30
      %s50 = sphi 0, %s50
      %s52 = sphi 0, %s50
      %s53 = sphi 0, %s52
      %s67 = sphi 0, %s53
      %s71 = sphi 0, %s71
      %s73 = sphi 0, %s71
      %s74 = sphi 0, %s73
      %s88 = sphi 0, %s74
      %s92 = sphi 0, %s92
      %s94 = sphi 0, %s92
      %s95 = sphi 0, %s94
      %s109 = sphi 0, %s95
      %s113 = sphi 0, %s113
      %s115 = sphi 0, %s113
      %s116 = sphi 0, %s115
      %s130 = sphi 0, %s116
      %s134 = sphi 0, %s134
      %s136 = sphi 0, %s134
      %s137 = sphi 0, %s136
      %s151 = sphi 0, %s137
      %s155 = sphi 0, %s155
      %s157 = sphi 0, %s155
      %s158 = sphi 0, %s157
      %s172 = sphi 0, %s158
      %s178 = sphi 0, %s180
      %s181 = sphi 0, %s178
      %s182 = sphi 0, %s181
      %s198 = sphi 0, %s182
    $region4: #{tpu_custom_call.1} parent=1 // loop_header_branch
      %19 = sbr.rel (%p17) target = $region8
    $region5: #{tpu_custom_call.1} parent=1 // loop_body
      %s21 = ssub.s32 %s16, 1
      %s22 = ssub.s32 %s16, 2
      %s23 = sadd.s32 %s16, 1
      %s24 = ssub.s32 %s16, %s23
      %p25 = scmp.eq.s32.totalorder %s24, 0
      %s27 = sadd.s32 %s26, 1
      %s28 = scalar_select %p25, %s26, %s27
      %p31 = pneg %p25
      %p32 = scmp.eq.s32.totalorder %s16, 1
      %p33 = por %p31, %p32
      %p34 = scmp.ne.s32.totalorder %s26, %s29
      %p35 = scmp.eq.s32.totalorder %s16, 0
      %p36 = por %p34, %p35
      %p37 = scmp.ne.s32.totalorder %s26, %s29
      %p38 = scmp.eq.s32.totalorder %s21, 1
      %p39 = por %p37, %p38
      %p40 = scmp.ne.s32.totalorder %s29, %s30
      %p41 = scmp.eq.s32.totalorder %s21, 0
      %p42 = por %p40, %p41
      %p43 = scmp.ne.s32.totalorder %s29, %s30
      %p44 = scmp.eq.s32.totalorder %s22, 1
      %p45 = por %p43, %p44
      %p47 = scmp.ne.s32.totalorder %s30, %s46
      %p48 = scmp.eq.s32.totalorder %s22, 0
      %p49 = por %p47, %p48
      %s51 = sadd.s32 %s50, 1
      %p54 = scmp.eq.s32.totalorder %s16, 1
      %p55 = scmp.ne.s32.totalorder %s50, %s52
      %p56 = scmp.eq.s32.totalorder %s16, 0
      %p57 = por %p55, %p56
      %p58 = scmp.ne.s32.totalorder %s50, %s52
      %p59 = scmp.eq.s32.totalorder %s21, 1
      %p60 = por %p58, %p59
      %p61 = scmp.ne.s32.totalorder %s52, %s53
      %p62 = scmp.eq.s32.totalorder %s21, 0
      %p63 = por %p61, %p62
      %p64 = scmp.ne.s32.totalorder %s52, %s53
      %p65 = scmp.eq.s32.totalorder %s22, 1
      %p66 = por %p64, %p65
      %p68 = scmp.ne.s32.totalorder %s53, %s67
      %p69 = scmp.eq.s32.totalorder %s22, 0
      %p70 = por %p68, %p69
      %s72 = sadd.s32 %s71, 1
      %p75 = scmp.eq.s32.totalorder %s16, 1
      %p76 = scmp.ne.s32.totalorder %s71, %s73
      %p77 = scmp.eq.s32.totalorder %s16, 0
      %p78 = por %p76, %p77
      %p79 = scmp.ne.s32.totalorder %s71, %s73
      %p80 = scmp.eq.s32.totalorder %s21, 1
      %p81 = por %p79, %p80
      %p82 = scmp.ne.s32.totalorder %s73, %s74
      %p83 = scmp.eq.s32.totalorder %s21, 0
      %p84 = por %p82, %p83
      %p85 = scmp.ne.s32.totalorder %s73, %s74
      %p86 = scmp.eq.s32.totalorder %s22, 1
      %p87 = por %p85, %p86
      %p89 = scmp.ne.s32.totalorder %s74, %s88
      %p90 = scmp.eq.s32.totalorder %s22, 0
      %p91 = por %p89, %p90
      %s93 = sadd.s32 %s92, 1
      %p96 = scmp.eq.s32.totalorder %s16, 1
      %p97 = scmp.ne.s32.totalorder %s92, %s94
      %p98 = scmp.eq.s32.totalorder %s16, 0
      %p99 = por %p97, %p98
      %p100 = scmp.ne.s32.totalorder %s92, %s94
      %p101 = scmp.eq.s32.totalorder %s21, 1
      %p102 = por %p100, %p101
      %p103 = scmp.ne.s32.totalorder %s94, %s95
      %p104 = scmp.eq.s32.totalorder %s21, 0
      %p105 = por %p103, %p104
      %p106 = scmp.ne.s32.totalorder %s94, %s95
      %p107 = scmp.eq.s32.totalorder %s22, 1
      %p108 = por %p106, %p107
      %p110 = scmp.ne.s32.totalorder %s95, %s109
      %p111 = scmp.eq.s32.totalorder %s22, 0
      %p112 = por %p110, %p111
      %s114 = sadd.s32 %s113, 1
      %p117 = scmp.eq.s32.totalorder %s16, 1
      %p118 = scmp.ne.s32.totalorder %s113, %s115
      %p119 = scmp.eq.s32.totalorder %s16, 0
      %p120 = por %p118, %p119
      %p121 = scmp.ne.s32.totalorder %s113, %s115
      %p122 = scmp.eq.s32.totalorder %s21, 1
      %p123 = por %p121, %p122
      %p124 = scmp.ne.s32.totalorder %s115, %s116
      %p125 = scmp.eq.s32.totalorder %s21, 0
      %p126 = por %p124, %p125
      %p127 = scmp.ne.s32.totalorder %s115, %s116
      %p128 = scmp.eq.s32.totalorder %s22, 1
      %p129 = por %p127, %p128
      %p131 = scmp.ne.s32.totalorder %s116, %s130
      %p132 = scmp.eq.s32.totalorder %s22, 0
      %p133 = por %p131, %p132
      %s135 = sadd.s32 %s134, 1
      %p138 = scmp.eq.s32.totalorder %s16, 1
      %p139 = scmp.ne.s32.totalorder %s134, %s136
      %p140 = scmp.eq.s32.totalorder %s16, 0
      %p141 = por %p139, %p140
      %p142 = scmp.ne.s32.totalorder %s134, %s136
      %p143 = scmp.eq.s32.totalorder %s21, 1
      %p144 = por %p142, %p143
      %p145 = scmp.ne.s32.totalorder %s136, %s137
      %p146 = scmp.eq.s32.totalorder %s21, 0
      %p147 = por %p145, %p146
      %p148 = scmp.ne.s32.totalorder %s136, %s137
      %p149 = scmp.eq.s32.totalorder %s22, 1
      %p150 = por %p148, %p149
      %p152 = scmp.ne.s32.totalorder %s137, %s151
      %p153 = scmp.eq.s32.totalorder %s22, 0
      %p154 = por %p152, %p153
      %s156 = sadd.s32 %s155, 1
      %p159 = scmp.eq.s32.totalorder %s16, 1
      %p160 = scmp.ne.s32.totalorder %s155, %s157
      %p161 = scmp.eq.s32.totalorder %s16, 0
      %p162 = por %p160, %p161
      %p163 = scmp.ne.s32.totalorder %s155, %s157
      %p164 = scmp.eq.s32.totalorder %s21, 1
      %p165 = por %p163, %p164
      %p166 = scmp.ne.s32.totalorder %s157, %s158
      %p167 = scmp.eq.s32.totalorder %s21, 0
      %p168 = por %p166, %p167
      %p169 = scmp.ne.s32.totalorder %s157, %s158
      %p170 = scmp.eq.s32.totalorder %s22, 1
      %p171 = por %p169, %p170
      %p173 = scmp.ne.s32.totalorder %s158, %s172
      %p174 = scmp.eq.s32.totalorder %s22, 0
      %p175 = por %p173, %p174
      %s176 = ssub.s32 %s16, %s23
      %p177 = scmp.eq.s32.totalorder %s176, 0
      %s179 = sadd.s32 %s178, 1
      %s180 = scalar_select %p177, %s178, %s179
      %p183 = pneg %p177
      %p184 = scmp.eq.s32.totalorder %s16, 1
      %p185 = por %p183, %p184
      %p186 = scmp.ne.s32.totalorder %s178, %s181
      %p187 = scmp.eq.s32.totalorder %s16, 0
      %p188 = por %p186, %p187
      %p189 = scmp.ne.s32.totalorder %s178, %s181
      %p190 = scmp.eq.s32.totalorder %s21, 1
      %p191 = por %p189, %p190
      %p192 = scmp.ne.s32.totalorder %s181, %s182
      %p193 = scmp.eq.s32.totalorder %s21, 0
      %p194 = por %p192, %p193
      %p195 = scmp.ne.s32.totalorder %s181, %s182
      %p196 = scmp.eq.s32.totalorder %s22, 1
      %p197 = por %p195, %p196
      %p199 = scmp.ne.s32.totalorder %s182, %s198
      %p200 = scmp.eq.s32.totalorder %s22, 0
      %p201 = por %p199, %p200
      %p202 = scmp.le.s32.totalorder 1, %s16
      %p203 = scmp.lt.s32.totalorder %s16, 3
      %p204 = pnand %p202, %p203
      %p205 = pneg %p204
      // Predicated region
      $region9: #{tpu_custom_call.1} parent=5 // pred_check
        _
      $region10: #{tpu_custom_call.1} parent=5 // pred_check_branch
        %207 = sbr.rel (%p204) target = $region12
      $region11: #{tpu_custom_call.1} parent=5 // pred_region
        %s208 = ssub.s32 %s16, 1
        // Predicated region
        $region13: #{tpu_custom_call.1} parent=11 // pred_check
          %p209 = pneg %p63
        $region14: #{tpu_custom_call.1} parent=11 // pred_check_branch
          %211 = sbr.rel (%p209) target = $region16
        $region15: #{tpu_custom_call.1} parent=11 // pred_region
          _
        $region16: #{tpu_custom_call.1} parent=11 // pred_fallthru
          _
        // Predicated region
        $region17: #{tpu_custom_call.1} parent=11 // pred_check
          %p212 = pneg %p84
        $region18: #{tpu_custom_call.1} parent=11 // pred_check_branch
          %214 = sbr.rel (%p212) target = $region20
        $region19: #{tpu_custom_call.1} parent=11 // pred_region
          _
        $region20: #{tpu_custom_call.1} parent=11 // pred_fallthru
          _
        // Predicated region
        $region21: #{tpu_custom_call.1} parent=11 // pred_check
          %p215 = pneg %p105
        $region22: #{tpu_custom_call.1} parent=11 // pred_check_branch
          %217 = sbr.rel (%p215) target = $region24
        $region23: #{tpu_custom_call.1} parent=11 // pred_region
          _
        $region24: #{tpu_custom_call.1} parent=11 // pred_fallthru
          _
        // Predicated region
        $region25: #{tpu_custom_call.1} parent=11 // pred_check
          %p218 = pneg %p126
        $region26: #{tpu_custom_call.1} parent=11 // pred_check_branch
          %220 = sbr.rel (%p218) target = $region28
        $region27: #{tpu_custom_call.1} parent=11 // pred_region
          _
        $region28: #{tpu_custom_call.1} parent=11 // pred_fallthru
          _
        // Predicated region
        $region29: #{tpu_custom_call.1} parent=11 // pred_check
          %p221 = pneg %p147
        $region30: #{tpu_custom_call.1} parent=11 // pred_check_branch
          %223 = sbr.rel (%p221) target = $region32
        $region31: #{tpu_custom_call.1} parent=11 // pred_region
          _
        $region32: #{tpu_custom_call.1} parent=11 // pred_fallthru
          _
        // Predicated region
        $region33: #{tpu_custom_call.1} parent=11 // pred_check
          %p224 = pneg %p168
        $region34: #{tpu_custom_call.1} parent=11 // pred_check_branch
          %226 = sbr.rel (%p224) target = $region36
        $region35: #{tpu_custom_call.1} parent=11 // pred_region
          _
        $region36: #{tpu_custom_call.1} parent=11 // pred_fallthru
          _
      $region12: #{tpu_custom_call.1} parent=5 // pred_fallthru
        _
      %p227 = scmp.lt.s32.totalorder %s16, 2
      // Predicated region
      $region37: #{tpu_custom_call.1} parent=5 // pred_check
        %p228 = pneg %p227
      $region38: #{tpu_custom_call.1} parent=5 // pred_check_branch
        %230 = sbr.rel (%p228) target = $region40
      $region39: #{tpu_custom_call.1} parent=5 // pred_region
        // Predicated region
        $region41: #{tpu_custom_call.1} parent=39 // pred_check
          %p231 = pneg %p36
        $region42: #{tpu_custom_call.1} parent=39 // pred_check_branch
          %233 = sbr.rel (%p231) target = $region44
        $region43: #{tpu_custom_call.1} parent=39 // pred_region
          %s234 = smul.u32 32, %s16
          %p235 = scmp.lt.s32.totalorder %s234, 63
          %s236 = scalar_select %p235, %s234, 63
          %s237 = smul.addr %s236, 4
          %s238 = scalar_lea.vmem %s0, %s237
          %s239 = smul.u32 32, %s16
        $region44: #{tpu_custom_call.1} parent=39 // pred_fallthru
          _
      $region40: #{tpu_custom_call.1} parent=5 // pred_fallthru
        _
      %p240 = scmp.le.s32.totalorder 1, %s16
      %p241 = scmp.lt.s32.totalorder %s16, 3
      %p242 = pnand %p240, %p241
      %p243 = pneg %p242
      // Predicated region
      $region45: #{tpu_custom_call.1} parent=5 // pred_check
        _
      $region46: #{tpu_custom_call.1} parent=5 // pred_check_branch
        %245 = sbr.rel (%p242) target = $region48
      $region47: #{tpu_custom_call.1} parent=5 // pred_region
        %s246 = ssub.s32 %s16, 1
        %s247 = smul.u32 32, %s21
        %p248 = scmp.lt.s32.totalorder %s247, 63
        %s249 = scalar_select %p248, %s247, 63
        %s250 = smul.addr %s249, 4
        %s251 = scalar_lea.vmem %s0, %s250
        %p252 = pneg %p42
        %p253 = pneg %p39
        %p254 = pneg %p63
        %p255 = pneg %p60
        %p256 = pneg %p84
        %p257 = pneg %p81
        %p258 = pneg %p105
        %p259 = pneg %p102
        %p260 = pneg %p126
        %p261 = pneg %p123
        %p262 = pneg %p147
        %p263 = pneg %p144
        %p264 = pneg %p168
        %p265 = pneg %p165
        %p266 = pneg %p194
        %p267 = pneg %p191
        %s268 = sand.u32 %s181, 1
        %s269 = scalar_lea.sflag [#allocation3], %s268
        %s270 = sand.u32 %s181, 1
        %s271 = smul.addr %s270, 256
        %s272 = scalar_lea.vmem [#allocation2], %s271
        %s273 = smul.u32 32, %s21
        %p274 = scmp.lt.s32.totalorder %s273, 63
        %s275 = scalar_select %p274, %s273, 63
        %s276 = smul.addr %s275, 4
        %s277 = scalar_lea.vmem %s0, %s276
        %s278 = smul.u32 32, %s21
        %s279 = smul.u32 32, %s21
        %v281 = vld [vmem:[%s277] sm:$0xf]
        %v282 = vld [vmem:[%s277 + $0x4] sm:$0xf]
        %v283 = vld [vmem:[%s277 + $0x8] sm:$0xf]
        %v284 = vld [vmem:[%s277 + $0xc] sm:$0xf]
        %v285 = vld [vmem:[%s277 + $0x10] sm:$0xf]
        %v286 = vld [vmem:[%s277 + $0x14] sm:$0xf]
        %v287 = vld [vmem:[%s277 + $0x18] sm:$0xf]
        %v288 = vld [vmem:[%s277 + $0x1c] sm:$0xf]
        %v289 = vld [vmem:[%s277 + $0x20] sm:$0xf]
        %v290 = vld [vmem:[%s277 + $0x24] sm:$0xf]
        %v291 = vld [vmem:[%s277 + $0x28] sm:$0xf]
        %v292 = vld [vmem:[%s277 + $0x2c] sm:$0xf]
        %v293 = vld [vmem:[%s277 + $0x30] sm:$0xf]
        %v294 = vld [vmem:[%s277 + $0x34] sm:$0xf]
        %v295 = vld [vmem:[%s277 + $0x38] sm:$0xf]
        %v296 = vld [vmem:[%s277 + $0x3c] sm:$0xf]
        %v297 = vld [vmem:[%s277 + $0x40] sm:$0xf]
        %v298 = vld [vmem:[%s277 + $0x44] sm:$0xf]
        %v299 = vld [vmem:[%s277 + $0x48] sm:$0xf]
        %v300 = vld [vmem:[%s277 + $0x4c] sm:$0xf]
        %v301 = vld [vmem:[%s277 + $0x50] sm:$0xf]
        %v302 = vld [vmem:[%s277 + $0x54] sm:$0xf]
        %v303 = vld [vmem:[%s277 + $0x58] sm:$0xf]
        %v304 = vld [vmem:[%s277 + $0x5c] sm:$0xf]
        %v305 = vld [vmem:[%s277 + $0x60] sm:$0xf]
        %v306 = vld [vmem:[%s277 + $0x64] sm:$0xf]
        %v307 = vld [vmem:[%s277 + $0x68] sm:$0xf]
        %v308 = vld [vmem:[%s277 + $0x6c] sm:$0xf]
        %v309 = vld [vmem:[%s277 + $0x70] sm:$0xf]
        %v310 = vld [vmem:[%s277 + $0x74] sm:$0xf]
        %v311 = vld [vmem:[%s277 + $0x78] sm:$0xf]
        %v312 = vld [vmem:[%s277 + $0x7c] sm:$0xf]
        %v313 = vld [vmem:[%s1] sm:$0xf]
        %v314 = vld [vmem:[%s1 + $0x4] sm:$0xf]
        %v315 = vld [vmem:[%s1 + $0x8] sm:$0xf]
        %v316 = vld [vmem:[%s1 + $0xc] sm:$0xf]
        %v317 = vld [vmem:[%s2] sm:$0x1]
        %v319 = vlaneseq
        %v320 = vshrl.u32 %v319, 7
        %v321 = vsub.s32 0, %v320
        %v322 = vrot.slane %v317, %v321
        %v356 = vunpack.c.l.b16 %v281
        %v357 = vunpack.c.l.b16 %v282
        %v358 = vunpack.c.l.b16 %v283
        %v359 = vunpack.c.l.b16 %v284
        %v360 = vunpack.c.l.b16 %v285
        %v361 = vunpack.c.l.b16 %v286
        %v362 = vunpack.c.l.b16 %v287
        %v363 = vunpack.c.l.b16 %v288
        %v364 = vunpack.c.l.b16 %v289
        %v365 = vunpack.c.l.b16 %v290
        %v366 = vunpack.c.l.b16 %v291
        %v367 = vunpack.c.l.b16 %v292
        %v368 = vunpack.c.l.b16 %v293
        %v369 = vunpack.c.l.b16 %v294
        %v370 = vunpack.c.l.b16 %v295
        %v371 = vunpack.c.l.b16 %v296
        %v372 = vunpack.c.l.b16 %v297
        %v373 = vunpack.c.l.b16 %v298
        %v374 = vunpack.c.l.b16 %v299
        %v375 = vunpack.c.l.b16 %v300
        %v376 = vunpack.c.l.b16 %v301
        %v377 = vunpack.c.l.b16 %v302
        %v378 = vunpack.c.l.b16 %v303
        %v379 = vunpack.c.l.b16 %v304
        %v380 = vunpack.c.l.b16 %v305
        %v381 = vunpack.c.l.b16 %v306
        %v382 = vunpack.c.l.b16 %v307
        %v383 = vunpack.c.l.b16 %v308
        %v384 = vunpack.c.l.b16 %v309
        %v385 = vunpack.c.l.b16 %v310
        %v386 = vunpack.c.l.b16 %v311
        %v387 = vunpack.c.l.b16 %v312
        %v388 = vpack.c.b16 %v357, %v356
        %v389 = vpack.c.b16 %v359, %v358
        %v390 = vpack.c.b16 %v361, %v360
        %v391 = vpack.c.b16 %v363, %v362
        %v392 = vpack.c.b16 %v365, %v364
        %v393 = vpack.c.b16 %v367, %v366
        %v394 = vpack.c.b16 %v369, %v368
        %v395 = vpack.c.b16 %v371, %v370
        %v396 = vpack.c.b16 %v373, %v372
        %v397 = vpack.c.b16 %v375, %v374
        %v398 = vpack.c.b16 %v377, %v376
        %v399 = vpack.c.b16 %v379, %v378
        %v400 = vpack.c.b16 %v381, %v380
        %v401 = vpack.c.b16 %v383, %v382
        %v402 = vpack.c.b16 %v385, %v384
        %v403 = vpack.c.b16 %v387, %v386
        %v408 = vunpack.c.l.b16 %v313
        %v409 = vunpack.c.l.b16 %v314
        %v410 = vunpack.c.l.b16 %v315
        %v411 = vunpack.c.l.b16 %v316
        %v412 = vpack.c.b16 %v409, %v408
        %v413 = vpack.c.b16 %v411, %v410
        %vm416 = vcmask 261120
        %v418 = vsel %vm416, %v388, 0
        %v421 = vsel %vm416, %v389, 0
        %v424 = vsel %vm416, %v390, 0
        %v427 = vsel %vm416, %v391, 0
        %v430 = vsel %vm416, %v392, 0
        %v433 = vsel %vm416, %v393, 0
        %v436 = vsel %vm416, %v394, 0
        %v439 = vsel %vm416, %v395, 0
        %v442 = vsel %vm416, %v396, 0
        %v445 = vsel %vm416, %v397, 0
        %v448 = vsel %vm416, %v398, 0
        %v451 = vsel %vm416, %v399, 0
        %v454 = vsel %vm416, %v400, 0
        %v457 = vsel %vm416, %v401, 0
        %v460 = vsel %vm416, %v402, 0
        %v463 = vsel %vm416, %v403, 0
        %465 = vmatprep.subr.bf16.mxu0 0
        %466 = vmatpush1.bf16.msra.mxu0 %v412
        %467 = vmatprep.subr.bf16.mxu0 0
        %468 = vmatpush1.bf16.msra.mxu0 %v413
        %469 = vmatprep.subr.bf16.mxu0 0
        %470 = vmatpush1.bf16.msra.mxu0 0
        %471 = vmatprep.subr.bf16.mxu0 0
        %472 = vmatpush1.bf16.msra.mxu0 0
        %473 = vmatprep.subr.bf16.mxu0 0
        %474 = vmatpush1.bf16.msra.mxu0 0
        %475 = vmatprep.subr.bf16.mxu0 0
        %476 = vmatpush1.bf16.msra.mxu0 0
        %477 = vmatprep.subr.bf16.mxu0 0
        %478 = vmatpush1.bf16.msra.mxu0 0
        %479 = vmatprep.subr.bf16.mxu0 0
        %480 = vmatpush1.bf16.msra.mxu0 0
        %481 = vmatprep.subr.bf16.mxu0 0
        %482 = vmatpush1.bf16.msra.mxu0 0
        %483 = vmatprep.subr.bf16.mxu0 0
        %484 = vmatpush1.bf16.msra.mxu0 0
        %485 = vmatprep.subr.bf16.mxu0 0
        %486 = vmatpush1.bf16.msra.mxu0 0
        %487 = vmatprep.subr.bf16.mxu0 0
        %488 = vmatpush1.bf16.msra.mxu0 0
        %489 = vmatprep.subr.bf16.mxu0 0
        %490 = vmatpush1.bf16.msra.mxu0 0
        %491 = vmatprep.subr.bf16.mxu0 0
        %492 = vmatpush1.bf16.msra.mxu0 0
        %493 = vmatprep.subr.bf16.mxu0 0
        %494 = vmatpush1.bf16.msra.mxu0 0
        %495 = vmatprep.subr.bf16.mxu0 0
        %496 = vmatpush1.bf16.msra.mxu0 0
        %497 = vmatprep.mubr.bf16.mxu0 0
        %498 = vmatmul.mubr.bf16.gmra.mrb[0].mxu0 %v418
        %v499 = vpop.f32.mrb[0].mxu0
        %v500 = vadd.f32 %v322, %v499
        %v501 = vpop.f32.mrb[0].mxu0
        %v502 = vpop.f32.mrb[0].mxu0
        %v503 = vadd.f32 %v322, %v502
        %v504 = vpop.f32.mrb[0].mxu0
        %505 = vmatprep.mubr.bf16.mxu0 0
        %506 = vmatmul.mubr.bf16.gmra.mrb[0].mxu0 %v421
        %v507 = vpop.f32.mrb[0].mxu0
        %v508 = vadd.f32 %v322, %v507
        %v509 = vpop.f32.mrb[0].mxu0
        %v510 = vpop.f32.mrb[0].mxu0
        %v511 = vadd.f32 %v322, %v510
        %v512 = vpop.f32.mrb[0].mxu0
        %513 = vmatprep.mubr.bf16.mxu0 0
        %514 = vmatmul.mubr.bf16.gmra.mrb[0].mxu0 %v424
        %v515 = vpop.f32.mrb[0].mxu0
        %v516 = vadd.f32 %v322, %v515
        %v517 = vpop.f32.mrb[0].mxu0
        %v518 = vpop.f32.mrb[0].mxu0
        %v519 = vadd.f32 %v322, %v518
        %v520 = vpop.f32.mrb[0].mxu0
        %521 = vmatprep.mubr.bf16.mxu0 0
        %522 = vmatmul.mubr.bf16.gmra.mrb[0].mxu0 %v427
        %v523 = vpop.f32.mrb[0].mxu0
        %v524 = vadd.f32 %v322, %v523
        %v525 = vpop.f32.mrb[0].mxu0
        %v526 = vpop.f32.mrb[0].mxu0
        %v527 = vadd.f32 %v322, %v526
        %v528 = vpop.f32.mrb[0].mxu0
        %529 = vmatprep.mubr.bf16.mxu0 0
        %530 = vmatmul.mubr.bf16.gmra.mrb[0].mxu0 %v430
        %v531 = vpop.f32.mrb[0].mxu0
        %v532 = vadd.f32 %v322, %v531
        %v533 = vpop.f32.mrb[0].mxu0
        %v534 = vpop.f32.mrb[0].mxu0
        %v535 = vadd.f32 %v322, %v534
        %v536 = vpop.f32.mrb[0].mxu0
        %537 = vmatprep.mubr.bf16.mxu0 0
        %538 = vmatmul.mubr.bf16.gmra.mrb[0].mxu0 %v433
        %v539 = vpop.f32.mrb[0].mxu0
        %v540 = vadd.f32 %v322, %v539
        %v541 = vpop.f32.mrb[0].mxu0
        %v542 = vpop.f32.mrb[0].mxu0
        %v543 = vadd.f32 %v322, %v542
        %v544 = vpop.f32.mrb[0].mxu0
        %545 = vmatprep.mubr.bf16.mxu0 0
        %546 = vmatmul.mubr.bf16.gmra.mrb[0].mxu0 %v436
        %v547 = vpop.f32.mrb[0].mxu0
        %v548 = vadd.f32 %v322, %v547
        %v549 = vpop.f32.mrb[0].mxu0
        %v550 = vpop.f32.mrb[0].mxu0
        %v551 = vadd.f32 %v322, %v550
        %v552 = vpop.f32.mrb[0].mxu0
        %553 = vmatprep.mubr.bf16.mxu0 0
        %554 = vmatmul.mubr.bf16.gmra.mrb[0].mxu0 %v439
        %v555 = vpop.f32.mrb[0].mxu0
        %v556 = vadd.f32 %v322, %v555
        %v557 = vpop.f32.mrb[0].mxu0
        %v558 = vpop.f32.mrb[0].mxu0
        %v559 = vadd.f32 %v322, %v558
        %v560 = vpop.f32.mrb[0].mxu0
        %561 = vmatprep.mubr.bf16.mxu0 0
        %562 = vmatmul.mubr.bf16.gmra.mrb[0].mxu0 %v442
        %v563 = vpop.f32.mrb[0].mxu0
        %v564 = vadd.f32 %v322, %v563
        %v565 = vpop.f32.mrb[0].mxu0
        %v566 = vpop.f32.mrb[0].mxu0
        %v567 = vadd.f32 %v322, %v566
        %v568 = vpop.f32.mrb[0].mxu0
        %569 = vmatprep.mubr.bf16.mxu0 0
        %570 = vmatmul.mubr.bf16.gmra.mrb[0].mxu0 %v445
        %v571 = vpop.f32.mrb[0].mxu0
        %v572 = vadd.f32 %v322, %v571
        %v573 = vpop.f32.mrb[0].mxu0
        %v574 = vpop.f32.mrb[0].mxu0
        %v575 = vadd.f32 %v322, %v574
        %v576 = vpop.f32.mrb[0].mxu0
        %577 = vmatprep.mubr.bf16.mxu0 0
        %578 = vmatmul.mubr.bf16.gmra.mrb[0].mxu0 %v448
        %v579 = vpop.f32.mrb[0].mxu0
        %v580 = vadd.f32 %v322, %v579
        %v581 = vpop.f32.mrb[0].mxu0
        %v582 = vpop.f32.mrb[0].mxu0
        %v583 = vadd.f32 %v322, %v582
        %v584 = vpop.f32.mrb[0].mxu0
        %585 = vmatprep.mubr.bf16.mxu0 0
        %586 = vmatmul.mubr.bf16.gmra.mrb[0].mxu0 %v451
        %v587 = vpop.f32.mrb[0].mxu0
        %v588 = vadd.f32 %v322, %v587
        %v589 = vpop.f32.mrb[0].mxu0
        %v590 = vpop.f32.mrb[0].mxu0
        %v591 = vadd.f32 %v322, %v590
        %v592 = vpop.f32.mrb[0].mxu0
        %593 = vmatprep.mubr.bf16.mxu0 0
        %594 = vmatmul.mubr.bf16.gmra.mrb[0].mxu0 %v454
        %v595 = vpop.f32.mrb[0].mxu0
        %v596 = vadd.f32 %v322, %v595
        %v597 = vpop.f32.mrb[0].mxu0
        %v598 = vpop.f32.mrb[0].mxu0
        %v599 = vadd.f32 %v322, %v598
        %v600 = vpop.f32.mrb[0].mxu0
        %601 = vmatprep.mubr.bf16.mxu0 0
        %602 = vmatmul.mubr.bf16.gmra.mrb[0].mxu0 %v457
        %v603 = vpop.f32.mrb[0].mxu0
        %v604 = vadd.f32 %v322, %v603
        %v605 = vpop.f32.mrb[0].mxu0
        %v606 = vpop.f32.mrb[0].mxu0
        %v607 = vadd.f32 %v322, %v606
        %v608 = vpop.f32.mrb[0].mxu0
        %609 = vmatprep.mubr.bf16.mxu0 0
        %610 = vmatmul.mubr.bf16.gmra.mrb[0].mxu0 %v460
        %v611 = vpop.f32.mrb[0].mxu0
        %v612 = vadd.f32 %v322, %v611
        %v613 = vpop.f32.mrb[0].mxu0
        %v614 = vpop.f32.mrb[0].mxu0
        %v615 = vadd.f32 %v322, %v614
        %v616 = vpop.f32.mrb[0].mxu0
        %617 = vmatprep.mubr.bf16.mxu0 0
        %618 = vmatmul.mubr.bf16.gmra.mrb[0].mxu0 %v463
        %v619 = vpop.f32.mrb[0].mxu0
        %v620 = vadd.f32 %v322, %v619
        %v621 = vpop.f32.mrb[0].mxu0
        %v622 = vpop.f32.mrb[0].mxu0
        %v623 = vadd.f32 %v322, %v622
        %v624 = vpop.f32.mrb[0].mxu0
        %625 = vdwg.mxu0
        %v626 = vmax.f32 %v500, 0.0
        %v627 = vmax.f32 %v503, 0.0
        %v628 = vmax.f32 %v508, 0.0
        %v629 = vmax.f32 %v511, 0.0
        %v630 = vmax.f32 %v516, 0.0
        %v631 = vmax.f32 %v519, 0.0
        %v632 = vmax.f32 %v524, 0.0
        %v633 = vmax.f32 %v527, 0.0
        %v634 = vmax.f32 %v532, 0.0
        %v635 = vmax.f32 %v535, 0.0
        %v636 = vmax.f32 %v540, 0.0
        %v637 = vmax.f32 %v543, 0.0
        %v638 = vmax.f32 %v548, 0.0
        %v639 = vmax.f32 %v551, 0.0
        %v640 = vmax.f32 %v556, 0.0
        %v641 = vmax.f32 %v559, 0.0
        %v642 = vmax.f32 %v564, 0.0
        %v643 = vmax.f32 %v567, 0.0
        %v644 = vmax.f32 %v572, 0.0
        %v645 = vmax.f32 %v575, 0.0
        %v646 = vmax.f32 %v580, 0.0
        %v647 = vmax.f32 %v583, 0.0
        %v648 = vmax.f32 %v588, 0.0
        %v649 = vmax.f32 %v591, 0.0
        %v650 = vmax.f32 %v596, 0.0
        %v651 = vmax.f32 %v599, 0.0
        %v652 = vmax.f32 %v604, 0.0
        %v653 = vmax.f32 %v607, 0.0
        %v654 = vmax.f32 %v612, 0.0
        %v655 = vmax.f32 %v615, 0.0
        %v656 = vmax.f32 %v620, 0.0
        %v657 = vmax.f32 %v623, 0.0
        %v658 = vpack.c.bf16 %v627, %v626
        %v659 = vpack.c.bf16 %v629, %v628
        %v660 = vpack.c.bf16 %v631, %v630
        %v661 = vpack.c.bf16 %v633, %v632
        %v662 = vpack.c.bf16 %v635, %v634
        %v663 = vpack.c.bf16 %v637, %v636
        %v664 = vpack.c.bf16 %v639, %v638
        %v665 = vpack.c.bf16 %v641, %v640
        %v666 = vpack.c.bf16 %v643, %v642
        %v667 = vpack.c.bf16 %v645, %v644
        %v668 = vpack.c.bf16 %v647, %v646
        %v669 = vpack.c.bf16 %v649, %v648
        %v670 = vpack.c.bf16 %v651, %v650
        %v671 = vpack.c.bf16 %v653, %v652
        %v672 = vpack.c.bf16 %v655, %v654
        %v673 = vpack.c.bf16 %v657, %v656
        %v674 = vld [vmem:[%s3] sm:$0xf]
        %v675 = vld [vmem:[%s3 + $0x4] sm:$0xf]
        %v676 = vld [vmem:[%s3 + $0x8] sm:$0xf]
        %v677 = vld [vmem:[%s3 + $0xc] sm:$0xf]
        %v678 = vld [vmem:[%s3 + $0x10] sm:$0xf]
        %v679 = vld [vmem:[%s3 + $0x14] sm:$0xf]
        %v680 = vld [vmem:[%s3 + $0x18] sm:$0xf]
        %v681 = vld [vmem:[%s3 + $0x1c] sm:$0xf]
        %v682 = vld [vmem:[%s3 + $0x20] sm:$0xf]
        %v683 = vld [vmem:[%s3 + $0x24] sm:$0xf]
        %v684 = vld [vmem:[%s3 + $0x28] sm:$0xf]
        %v685 = vld [vmem:[%s3 + $0x2c] sm:$0xf]
        %v686 = vld [vmem:[%s3 + $0x30] sm:$0xf]
        %v687 = vld [vmem:[%s3 + $0x34] sm:$0xf]
        %v688 = vld [vmem:[%s3 + $0x38] sm:$0xf]
        %v689 = vld [vmem:[%s3 + $0x3c] sm:$0xf]
        %v690 = vld [vmem:[%s4] sm:$0x1]
        %v692 = vlaneseq
        %v693 = vshrl.u32 %v692, 7
        %v694 = vsub.s32 0, %v693
        %v695 = vrot.slane %v690, %v694
        %v713 = vunpack.c.l.b16 %v674
        %v714 = vunpack.c.l.b16 %v675
        %v715 = vunpack.c.l.b16 %v676
        %v716 = vunpack.c.l.b16 %v677
        %v717 = vunpack.c.l.b16 %v678
        %v718 = vunpack.c.l.b16 %v679
        %v719 = vunpack.c.l.b16 %v680
        %v720 = vunpack.c.l.b16 %v681
        %v721 = vunpack.c.l.b16 %v682
        %v722 = vunpack.c.l.b16 %v683
        %v723 = vunpack.c.l.b16 %v684
        %v724 = vunpack.c.l.b16 %v685
        %v725 = vunpack.c.l.b16 %v686
        %v726 = vunpack.c.l.b16 %v687
        %v727 = vunpack.c.l.b16 %v688
        %v728 = vunpack.c.l.b16 %v689
        %v729 = vpack.c.b16 %v714, %v713
        %v730 = vpack.c.b16 %v716, %v715
        %v731 = vpack.c.b16 %v718, %v717
        %v732 = vpack.c.b16 %v720, %v719
        %v733 = vpack.c.b16 %v722, %v721
        %v734 = vpack.c.b16 %v724, %v723
        %v735 = vpack.c.b16 %v726, %v725
        %v736 = vpack.c.b16 %v728, %v727
        %745 = vmatprep.subr.bf16.mxu0 0
        %746 = vmatpush1.bf16.msra.mxu0 %v729
        %747 = vmatprep.subr.bf16.mxu0 0
        %748 = vmatpush1.bf16.msra.mxu0 %v730
        %749 = vmatprep.subr.bf16.mxu0 0
        %750 = vmatpush1.bf16.msra.mxu0 %v731
        %751 = vmatprep.subr.bf16.mxu0 0
        %752 = vmatpush1.bf16.msra.mxu0 %v732
        %753 = vmatprep.subr.bf16.mxu0 0
        %754 = vmatpush1.bf16.msra.mxu0 %v733
        %755 = vmatprep.subr.bf16.mxu0 0
        %756 = vmatpush1.bf16.msra.mxu0 %v734
        %757 = vmatprep.subr.bf16.mxu0 0
        %758 = vmatpush1.bf16.msra.mxu0 %v735
        %759 = vmatprep.subr.bf16.mxu0 0
        %760 = vmatpush1.bf16.msra.mxu0 %v736
        %761 = vmatprep.subr.bf16.mxu0 0
        %762 = vmatpush1.bf16.msra.mxu0 0
        %763 = vmatprep.subr.bf16.mxu0 0
        %764 = vmatpush1.bf16.msra.mxu0 0
        %765 = vmatprep.subr.bf16.mxu0 0
        %766 = vmatpush1.bf16.msra.mxu0 0
        %767 = vmatprep.subr.bf16.mxu0 0
        %768 = vmatpush1.bf16.msra.mxu0 0
        %769 = vmatprep.subr.bf16.mxu0 0
        %770 = vmatpush1.bf16.msra.mxu0 0
        %771 = vmatprep.subr.bf16.mxu0 0
        %772 = vmatpush1.bf16.msra.mxu0 0
        %773 = vmatprep.subr.bf16.mxu0 0
        %774 = vmatpush1.bf16.msra.mxu0 0
        %775 = vmatprep.subr.bf16.mxu0 0
        %776 = vmatpush1.bf16.msra.mxu0 0
        %777 = vmatprep.mubr.bf16.mxu0 0
        %778 = vmatmul.mubr.bf16.gmra.mrb[0].mxu0 %v658
        %v779 = vpop.f32.mrb[0].mxu0
        %v780 = vadd.f32 %v695, %v779
        %v781 = vpop.f32.mrb[0].mxu0
        %v782 = vpop.f32.mrb[0].mxu0
        %v783 = vadd.f32 %v695, %v782
        %v784 = vpop.f32.mrb[0].mxu0
        %785 = vmatprep.mubr.bf16.mxu0 0
        %786 = vmatmul.mubr.bf16.gmra.mrb[0].mxu0 %v659
        %v787 = vpop.f32.mrb[0].mxu0
        %v788 = vadd.f32 %v695, %v787
        %v789 = vpop.f32.mrb[0].mxu0
        %v790 = vpop.f32.mrb[0].mxu0
        %v791 = vadd.f32 %v695, %v790
        %v792 = vpop.f32.mrb[0].mxu0
        %793 = vmatprep.mubr.bf16.mxu0 0
        %794 = vmatmul.mubr.bf16.gmra.mrb[0].mxu0 %v660
        %v795 = vpop.f32.mrb[0].mxu0
        %v796 = vadd.f32 %v695, %v795
        %v797 = vpop.f32.mrb[0].mxu0
        %v798 = vpop.f32.mrb[0].mxu0
        %v799 = vadd.f32 %v695, %v798
        %v800 = vpop.f32.mrb[0].mxu0
        %801 = vmatprep.mubr.bf16.mxu0 0
        %802 = vmatmul.mubr.bf16.gmra.mrb[0].mxu0 %v661
        %v803 = vpop.f32.mrb[0].mxu0
        %v804 = vadd.f32 %v695, %v803
        %v805 = vpop.f32.mrb[0].mxu0
        %v806 = vpop.f32.mrb[0].mxu0
        %v807 = vadd.f32 %v695, %v806
        %v808 = vpop.f32.mrb[0].mxu0
        %809 = vmatprep.mubr.bf16.mxu0 0
        %810 = vmatmul.mubr.bf16.gmra.mrb[0].mxu0 %v662
        %v811 = vpop.f32.mrb[0].mxu0
        %v812 = vadd.f32 %v695, %v811
        %v813 = vpop.f32.mrb[0].mxu0
        %v814 = vpop.f32.mrb[0].mxu0
        %v815 = vadd.f32 %v695, %v814
        %v816 = vpop.f32.mrb[0].mxu0
        %817 = vmatprep.mubr.bf16.mxu0 0
        %818 = vmatmul.mubr.bf16.gmra.mrb[0].mxu0 %v663
        %v819 = vpop.f32.mrb[0].mxu0
        %v820 = vadd.f32 %v695, %v819
        %v821 = vpop.f32.mrb[0].mxu0
        %v822 = vpop.f32.mrb[0].mxu0
        %v823 = vadd.f32 %v695, %v822
        %v824 = vpop.f32.mrb[0].mxu0
        %825 = vmatprep.mubr.bf16.mxu0 0
        %826 = vmatmul.mubr.bf16.gmra.mrb[0].mxu0 %v664
        %v827 = vpop.f32.mrb[0].mxu0
        %v828 = vadd.f32 %v695, %v827
        %v829 = vpop.f32.mrb[0].mxu0
        %v830 = vpop.f32.mrb[0].mxu0
        %v831 = vadd.f32 %v695, %v830
        %v832 = vpop.f32.mrb[0].mxu0
        %833 = vmatprep.mubr.bf16.mxu0 0
        %834 = vmatmul.mubr.bf16.gmra.mrb[0].mxu0 %v665
        %v835 = vpop.f32.mrb[0].mxu0
        %v836 = vadd.f32 %v695, %v835
        %v837 = vpop.f32.mrb[0].mxu0
        %v838 = vpop.f32.mrb[0].mxu0
        %v839 = vadd.f32 %v695, %v838
        %v840 = vpop.f32.mrb[0].mxu0
        %841 = vmatprep.mubr.bf16.mxu0 0
        %842 = vmatmul.mubr.bf16.gmra.mrb[0].mxu0 %v666
        %v843 = vpop.f32.mrb[0].mxu0
        %v844 = vadd.f32 %v695, %v843
        %v845 = vpop.f32.mrb[0].mxu0
        %v846 = vpop.f32.mrb[0].mxu0
        %v847 = vadd.f32 %v695, %v846
        %v848 = vpop.f32.mrb[0].mxu0
        %849 = vmatprep.mubr.bf16.mxu0 0
        %850 = vmatmul.mubr.bf16.gmra.mrb[0].mxu0 %v667
        %v851 = vpop.f32.mrb[0].mxu0
        %v852 = vadd.f32 %v695, %v851
        %v853 = vpop.f32.mrb[0].mxu0
        %v854 = vpop.f32.mrb[0].mxu0
        %v855 = vadd.f32 %v695, %v854
        %v856 = vpop.f32.mrb[0].mxu0
        %857 = vmatprep.mubr.bf16.mxu0 0
        %858 = vmatmul.mubr.bf16.gmra.mrb[0].mxu0 %v668
        %v859 = vpop.f32.mrb[0].mxu0
        %v860 = vadd.f32 %v695, %v859
        %v861 = vpop.f32.mrb[0].mxu0
        %v862 = vpop.f32.mrb[0].mxu0
        %v863 = vadd.f32 %v695, %v862
        %v864 = vpop.f32.mrb[0].mxu0
        %865 = vmatprep.mubr.bf16.mxu0 0
        %866 = vmatmul.mubr.bf16.gmra.mrb[0].mxu0 %v669
        %v867 = vpop.f32.mrb[0].mxu0
        %v868 = vadd.f32 %v695, %v867
        %v869 = vpop.f32.mrb[0].mxu0
        %v870 = vpop.f32.mrb[0].mxu0
        %v871 = vadd.f32 %v695, %v870
        %v872 = vpop.f32.mrb[0].mxu0
        %873 = vmatprep.mubr.bf16.mxu0 0
        %874 = vmatmul.mubr.bf16.gmra.mrb[0].mxu0 %v670
        %v875 = vpop.f32.mrb[0].mxu0
        %v876 = vadd.f32 %v695, %v875
        %v877 = vpop.f32.mrb[0].mxu0
        %v878 = vpop.f32.mrb[0].mxu0
        %v879 = vadd.f32 %v695, %v878
        %v880 = vpop.f32.mrb[0].mxu0
        %881 = vmatprep.mubr.bf16.mxu0 0
        %882 = vmatmul.mubr.bf16.gmra.mrb[0].mxu0 %v671
        %v883 = vpop.f32.mrb[0].mxu0
        %v884 = vadd.f32 %v695, %v883
        %v885 = vpop.f32.mrb[0].mxu0
        %v886 = vpop.f32.mrb[0].mxu0
        %v887 = vadd.f32 %v695, %v886
        %v888 = vpop.f32.mrb[0].mxu0
        %889 = vmatprep.mubr.bf16.mxu0 0
        %890 = vmatmul.mubr.bf16.gmra.mrb[0].mxu0 %v672
        %v891 = vpop.f32.mrb[0].mxu0
        %v892 = vadd.f32 %v695, %v891
        %v893 = vpop.f32.mrb[0].mxu0
        %v894 = vpop.f32.mrb[0].mxu0
        %v895 = vadd.f32 %v695, %v894
        %v896 = vpop.f32.mrb[0].mxu0
        %897 = vmatprep.mubr.bf16.mxu0 0
        %898 = vmatmul.mubr.bf16.gmra.mrb[0].mxu0 %v673
        %v899 = vpop.f32.mrb[0].mxu0
        %v900 = vadd.f32 %v695, %v899
        %v901 = vpop.f32.mrb[0].mxu0
        %v902 = vpop.f32.mrb[0].mxu0
        %v903 = vadd.f32 %v695, %v902
        %v904 = vpop.f32.mrb[0].mxu0
        %905 = vdwg.mxu0
        %v906 = vmax.f32 %v780, 0.0
        %v907 = vmax.f32 %v783, 0.0
        %v908 = vmax.f32 %v788, 0.0
        %v909 = vmax.f32 %v791, 0.0
        %v910 = vmax.f32 %v796, 0.0
        %v911 = vmax.f32 %v799, 0.0
        %v912 = vmax.f32 %v804, 0.0
        %v913 = vmax.f32 %v807, 0.0
        %v914 = vmax.f32 %v812, 0.0
        %v915 = vmax.f32 %v815, 0.0
        %v916 = vmax.f32 %v820, 0.0
        %v917 = vmax.f32 %v823, 0.0
        %v918 = vmax.f32 %v828, 0.0
        %v919 = vmax.f32 %v831, 0.0
        %v920 = vmax.f32 %v836, 0.0
        %v921 = vmax.f32 %v839, 0.0
        %v922 = vmax.f32 %v844, 0.0
        %v923 = vmax.f32 %v847, 0.0
        %v924 = vmax.f32 %v852, 0.0
        %v925 = vmax.f32 %v855, 0.0
        %v926 = vmax.f32 %v860, 0.0
        %v927 = vmax.f32 %v863, 0.0
        %v928 = vmax.f32 %v868, 0.0
        %v929 = vmax.f32 %v871, 0.0
        %v930 = vmax.f32 %v876, 0.0
        %v931 = vmax.f32 %v879, 0.0
        %v932 = vmax.f32 %v884, 0.0
        %v933 = vmax.f32 %v887, 0.0
        %v934 = vmax.f32 %v892, 0.0
        %v935 = vmax.f32 %v895, 0.0
        %v936 = vmax.f32 %v900, 0.0
        %v937 = vmax.f32 %v903, 0.0
        %v938 = vpack.c.bf16 %v907, %v906
        %v939 = vpack.c.bf16 %v909, %v908
        %v940 = vpack.c.bf16 %v911, %v910
        %v941 = vpack.c.bf16 %v913, %v912
        %v942 = vpack.c.bf16 %v915, %v914
        %v943 = vpack.c.bf16 %v917, %v916
        %v944 = vpack.c.bf16 %v919, %v918
        %v945 = vpack.c.bf16 %v921, %v920
        %v946 = vpack.c.bf16 %v923, %v922
        %v947 = vpack.c.bf16 %v925, %v924
        %v948 = vpack.c.bf16 %v927, %v926
        %v949 = vpack.c.bf16 %v929, %v928
        %v950 = vpack.c.bf16 %v931, %v930
        %v951 = vpack.c.bf16 %v933, %v932
        %v952 = vpack.c.bf16 %v935, %v934
        %v953 = vpack.c.bf16 %v937, %v936
        %v954 = vld [vmem:[%s5] sm:$0xf]
        %v955 = vld [vmem:[%s5 + $0x4] sm:$0xf]
        %v956 = vld [vmem:[%s5 + $0x8] sm:$0xf]
        %v957 = vld [vmem:[%s5 + $0xc] sm:$0xf]
        %v958 = vld [vmem:[%s5 + $0x10] sm:$0xf]
        %v959 = vld [vmem:[%s5 + $0x14] sm:$0xf]
        %v960 = vld [vmem:[%s5 + $0x18] sm:$0xf]
        %v961 = vld [vmem:[%s5 + $0x1c] sm:$0xf]
        %v962 = vld [vmem:[%s5 + $0x20] sm:$0xf]
        %v963 = vld [vmem:[%s5 + $0x24] sm:$0xf]
        %v964 = vld [vmem:[%s5 + $0x28] sm:$0xf]
        %v965 = vld [vmem:[%s5 + $0x2c] sm:$0xf]
        %v966 = vld [vmem:[%s5 + $0x30] sm:$0xf]
        %v967 = vld [vmem:[%s5 + $0x34] sm:$0xf]
        %v968 = vld [vmem:[%s5 + $0x38] sm:$0xf]
        %v969 = vld [vmem:[%s5 + $0x3c] sm:$0xf]
        %v970 = vld [vmem:[%s6] sm:$0x1]
        %v972 = vlaneseq
        %v973 = vshrl.u32 %v972, 7
        %v974 = vsub.s32 0, %v973
        %v975 = vrot.slane %v970, %v974
        %v993 = vunpack.c.l.b16 %v954
        %v994 = vunpack.c.l.b16 %v955
        %v995 = vunpack.c.l.b16 %v956
        %v996 = vunpack.c.l.b16 %v957
        %v997 = vunpack.c.l.b16 %v958
        %v998 = vunpack.c.l.b16 %v959
        %v999 = vunpack.c.l.b16 %v960
        %v1000 = vunpack.c.l.b16 %v961
        %v1001 = vunpack.c.l.b16 %v962
        %v1002 = vunpack.c.l.b16 %v963
        %v1003 = vunpack.c.l.b16 %v964
        %v1004 = vunpack.c.l.b16 %v965
        %v1005 = vunpack.c.l.b16 %v966
        %v1006 = vunpack.c.l.b16 %v967
        %v1007 = vunpack.c.l.b16 %v968
        %v1008 = vunpack.c.l.b16 %v969
        %v1009 = vpack.c.b16 %v994, %v993
        %v1010 = vpack.c.b16 %v996, %v995
        %v1011 = vpack.c.b16 %v998, %v997
        %v1012 = vpack.c.b16 %v1000, %v999
        %v1013 = vpack.c.b16 %v1002, %v1001
        %v1014 = vpack.c.b16 %v1004, %v1003
        %v1015 = vpack.c.b16 %v1006, %v1005
        %v1016 = vpack.c.b16 %v1008, %v1007
        %1025 = vmatprep.subr.bf16.mxu0 0
        %1026 = vmatpush1.bf16.msra.mxu0 %v1009
        %1027 = vmatprep.subr.bf16.mxu0 0
        %1028 = vmatpush1.bf16.msra.mxu0 %v1010
        %1029 = vmatprep.subr.bf16.mxu0 0
        %1030 = vmatpush1.bf16.msra.mxu0 %v1011
        %1031 = vmatprep.subr.bf16.mxu0 0
        %1032 = vmatpush1.bf16.msra.mxu0 %v1012
        %1033 = vmatprep.subr.bf16.mxu0 0
        %1034 = vmatpush1.bf16.msra.mxu0 %v1013
        %1035 = vmatprep.subr.bf16.mxu0 0
        %1036 = vmatpush1.bf16.msra.mxu0 %v1014
        %1037 = vmatprep.subr.bf16.mxu0 0
        %1038 = vmatpush1.bf16.msra.mxu0 %v1015
        %1039 = vmatprep.subr.bf16.mxu0 0
        %1040 = vmatpush1.bf16.msra.mxu0 %v1016
        %1041 = vmatprep.subr.bf16.mxu0 0
        %1042 = vmatpush1.bf16.msra.mxu0 0
        %1043 = vmatprep.subr.bf16.mxu0 0
        %1044 = vmatpush1.bf16.msra.mxu0 0
        %1045 = vmatprep.subr.bf16.mxu0 0
        %1046 = vmatpush1.bf16.msra.mxu0 0
        %1047 = vmatprep.subr.bf16.mxu0 0
        %1048 = vmatpush1.bf16.msra.mxu0 0
        %1049 = vmatprep.subr.bf16.mxu0 0
        %1050 = vmatpush1.bf16.msra.mxu0 0
        %1051 = vmatprep.subr.bf16.mxu0 0
        %1052 = vmatpush1.bf16.msra.mxu0 0
        %1053 = vmatprep.subr.bf16.mxu0 0
        %1054 = vmatpush1.bf16.msra.mxu0 0
        %1055 = vmatprep.subr.bf16.mxu0 0
        %1056 = vmatpush1.bf16.msra.mxu0 0
        %1057 = vmatprep.mubr.bf16.mxu0 0
        %1058 = vmatmul.mubr.bf16.gmra.mrb[0].mxu0 %v938
        %v1059 = vpop.f32.mrb[0].mxu0
        %v1060 = vadd.f32 %v975, %v1059
        %v1061 = vpop.f32.mrb[0].mxu0
        %v1062 = vpop.f32.mrb[0].mxu0
        %v1063 = vadd.f32 %v975, %v1062
        %v1064 = vpop.f32.mrb[0].mxu0
        %1065 = vmatprep.mubr.bf16.mxu0 0
        %1066 = vmatmul.mubr.bf16.gmra.mrb[0].mxu0 %v939
        %v1067 = vpop.f32.mrb[0].mxu0
        %v1068 = vadd.f32 %v975, %v1067
        %v1069 = vpop.f32.mrb[0].mxu0
        %v1070 = vpop.f32.mrb[0].mxu0
        %v1071 = vadd.f32 %v975, %v1070
        %v1072 = vpop.f32.mrb[0].mxu0
        %1073 = vmatprep.mubr.bf16.mxu0 0
        %1074 = vmatmul.mubr.bf16.gmra.mrb[0].mxu0 %v940
        %v1075 = vpop.f32.mrb[0].mxu0
        %v1076 = vadd.f32 %v975, %v1075
        %v1077 = vpop.f32.mrb[0].mxu0
        %v1078 = vpop.f32.mrb[0].mxu0
        %v1079 = vadd.f32 %v975, %v1078
        %v1080 = vpop.f32.mrb[0].mxu0
        %1081 = vmatprep.mubr.bf16.mxu0 0
        %1082 = vmatmul.mubr.bf16.gmra.mrb[0].mxu0 %v941
        %v1083 = vpop.f32.mrb[0].mxu0
        %v1084 = vadd.f32 %v975, %v1083
        %v1085 = vpop.f32.mrb[0].mxu0
        %v1086 = vpop.f32.mrb[0].mxu0
        %v1087 = vadd.f32 %v975, %v1086
        %v1088 = vpop.f32.mrb[0].mxu0
        %1089 = vmatprep.mubr.bf16.mxu0 0
        %1090 = vmatmul.mubr.bf16.gmra.mrb[0].mxu0 %v942
        %v1091 = vpop.f32.mrb[0].mxu0
        %v1092 = vadd.f32 %v975, %v1091
        %v1093 = vpop.f32.mrb[0].mxu0
        %v1094 = vpop.f32.mrb[0].mxu0
        %v1095 = vadd.f32 %v975, %v1094
        %v1096 = vpop.f32.mrb[0].mxu0
        %1097 = vmatprep.mubr.bf16.mxu0 0
        %1098 = vmatmul.mubr.bf16.gmra.mrb[0].mxu0 %v943
        %v1099 = vpop.f32.mrb[0].mxu0
        %v1100 = vadd.f32 %v975, %v1099
        %v1101 = vpop.f32.mrb[0].mxu0
        %v1102 = vpop.f32.mrb[0].mxu0
        %v1103 = vadd.f32 %v975, %v1102
        %v1104 = vpop.f32.mrb[0].mxu0
        %1105 = vmatprep.mubr.bf16.mxu0 0
        %1106 = vmatmul.mubr.bf16.gmra.mrb[0].mxu0 %v944
        %v1107 = vpop.f32.mrb[0].mxu0
        %v1108 = vadd.f32 %v975, %v1107
        %v1109 = vpop.f32.mrb[0].mxu0
        %v1110 = vpop.f32.mrb[0].mxu0
        %v1111 = vadd.f32 %v975, %v1110
        %v1112 = vpop.f32.mrb[0].mxu0
        %1113 = vmatprep.mubr.bf16.mxu0 0
        %1114 = vmatmul.mubr.bf16.gmra.mrb[0].mxu0 %v945
        %v1115 = vpop.f32.mrb[0].mxu0
        %v1116 = vadd.f32 %v975, %v1115
        %v1117 = vpop.f32.mrb[0].mxu0
        %v1118 = vpop.f32.mrb[0].mxu0
        %v1119 = vadd.f32 %v975, %v1118
        %v1120 = vpop.f32.mrb[0].mxu0
        %1121 = vmatprep.mubr.bf16.mxu0 0
        %1122 = vmatmul.mubr.bf16.gmra.mrb[0].mxu0 %v946
        %v1123 = vpop.f32.mrb[0].mxu0
        %v1124 = vadd.f32 %v975, %v1123
        %v1125 = vpop.f32.mrb[0].mxu0
        %v1126 = vpop.f32.mrb[0].mxu0
        %v1127 = vadd.f32 %v975, %v1126
        %v1128 = vpop.f32.mrb[0].mxu0
        %1129 = vmatprep.mubr.bf16.mxu0 0
        %1130 = vmatmul.mubr.bf16.gmra.mrb[0].mxu0 %v947
        %v1131 = vpop.f32.mrb[0].mxu0
        %v1132 = vadd.f32 %v975, %v1131
        %v1133 = vpop.f32.mrb[0].mxu0
        %v1134 = vpop.f32.mrb[0].mxu0
        %v1135 = vadd.f32 %v975, %v1134
        %v1136 = vpop.f32.mrb[0].mxu0
        %1137 = vmatprep.mubr.bf16.mxu0 0
        %1138 = vmatmul.mubr.bf16.gmra.mrb[0].mxu0 %v948
        %v1139 = vpop.f32.mrb[0].mxu0
        %v1140 = vadd.f32 %v975, %v1139
        %v1141 = vpop.f32.mrb[0].mxu0
        %v1142 = vpop.f32.mrb[0].mxu0
        %v1143 = vadd.f32 %v975, %v1142
        %v1144 = vpop.f32.mrb[0].mxu0
        %1145 = vmatprep.mubr.bf16.mxu0 0
        %1146 = vmatmul.mubr.bf16.gmra.mrb[0].mxu0 %v949
        %v1147 = vpop.f32.mrb[0].mxu0
        %v1148 = vadd.f32 %v975, %v1147
        %v1149 = vpop.f32.mrb[0].mxu0
        %v1150 = vpop.f32.mrb[0].mxu0
        %v1151 = vadd.f32 %v975, %v1150
        %v1152 = vpop.f32.mrb[0].mxu0
        %1153 = vmatprep.mubr.bf16.mxu0 0
        %1154 = vmatmul.mubr.bf16.gmra.mrb[0].mxu0 %v950
        %v1155 = vpop.f32.mrb[0].mxu0
        %v1156 = vadd.f32 %v975, %v1155
        %v1157 = vpop.f32.mrb[0].mxu0
        %v1158 = vpop.f32.mrb[0].mxu0
        %v1159 = vadd.f32 %v975, %v1158
        %v1160 = vpop.f32.mrb[0].mxu0
        %1161 = vmatprep.mubr.bf16.mxu0 0
        %1162 = vmatmul.mubr.bf16.gmra.mrb[0].mxu0 %v951
        %v1163 = vpop.f32.mrb[0].mxu0
        %v1164 = vadd.f32 %v975, %v1163
        %v1165 = vpop.f32.mrb[0].mxu0
        %v1166 = vpop.f32.mrb[0].mxu0
        %v1167 = vadd.f32 %v975, %v1166
        %v1168 = vpop.f32.mrb[0].mxu0
        %1169 = vmatprep.mubr.bf16.mxu0 0
        %1170 = vmatmul.mubr.bf16.gmra.mrb[0].mxu0 %v952
        %v1171 = vpop.f32.mrb[0].mxu0
        %v1172 = vadd.f32 %v975, %v1171
        %v1173 = vpop.f32.mrb[0].mxu0
        %v1174 = vpop.f32.mrb[0].mxu0
        %v1175 = vadd.f32 %v975, %v1174
        %v1176 = vpop.f32.mrb[0].mxu0
        %1177 = vmatprep.mubr.bf16.mxu0 0
        %1178 = vmatmul.mubr.bf16.gmra.mrb[0].mxu0 %v953
        %v1179 = vpop.f32.mrb[0].mxu0
        %v1180 = vadd.f32 %v975, %v1179
        %v1181 = vpop.f32.mrb[0].mxu0
        %v1182 = vpop.f32.mrb[0].mxu0
        %v1183 = vadd.f32 %v975, %v1182
        %v1184 = vpop.f32.mrb[0].mxu0
        %1185 = vdwg.mxu0
        %1186 = vst [vmem:[%s272] sm:$0xff] %v1060
        %1187 = vst [vmem:[%s272 + $0x8] sm:$0xff] %v1063
        %1188 = vst [vmem:[%s272 + $0x10] sm:$0xff] %v1068
        %1189 = vst [vmem:[%s272 + $0x18] sm:$0xff] %v1071
        %1190 = vst [vmem:[%s272 + $0x20] sm:$0xff] %v1076
        %1191 = vst [vmem:[%s272 + $0x28] sm:$0xff] %v1079
        %1192 = vst [vmem:[%s272 + $0x30] sm:$0xff] %v1084
        %1193 = vst [vmem:[%s272 + $0x38] sm:$0xff] %v1087
        %1194 = vst [vmem:[%s272 + $0x40] sm:$0xff] %v1092
        %1195 = vst [vmem:[%s272 + $0x48] sm:$0xff] %v1095
        %1196 = vst [vmem:[%s272 + $0x50] sm:$0xff] %v1100
        %1197 = vst [vmem:[%s272 + $0x58] sm:$0xff] %v1103
        %1198 = vst [vmem:[%s272 + $0x60] sm:$0xff] %v1108
        %1199 = vst [vmem:[%s272 + $0x68] sm:$0xff] %v1111
        %1200 = vst [vmem:[%s272 + $0x70] sm:$0xff] %v1116
        %1201 = vst [vmem:[%s272 + $0x78] sm:$0xff] %v1119
        %1202 = vst [vmem:[%s272 + $0x80] sm:$0xff] %v1124
        %1203 = vst [vmem:[%s272 + $0x88] sm:$0xff] %v1127
        %1204 = vst [vmem:[%s272 + $0x90] sm:$0xff] %v1132
        %1205 = vst [vmem:[%s272 + $0x98] sm:$0xff] %v1135
        %1206 = vst [vmem:[%s272 + $0xa0] sm:$0xff] %v1140
        %1207 = vst [vmem:[%s272 + $0xa8] sm:$0xff] %v1143
        %1208 = vst [vmem:[%s272 + $0xb0] sm:$0xff] %v1148
        %1209 = vst [vmem:[%s272 + $0xb8] sm:$0xff] %v1151
        %1210 = vst [vmem:[%s272 + $0xc0] sm:$0xff] %v1156
        %1211 = vst [vmem:[%s272 + $0xc8] sm:$0xff] %v1159
        %1212 = vst [vmem:[%s272 + $0xd0] sm:$0xff] %v1164
        %1213 = vst [vmem:[%s272 + $0xd8] sm:$0xff] %v1167
        %1214 = vst [vmem:[%s272 + $0xe0] sm:$0xff] %v1172
        %1215 = vst [vmem:[%s272 + $0xe8] sm:$0xff] %v1175
        %1216 = vst [vmem:[%s272 + $0xf0] sm:$0xff] %v1180
        %1217 = vst [vmem:[%s272 + $0xf8] sm:$0xff] %v1183
        %s1218 = sand.u32 %s181, 1
        %s1219 = scalar_lea.sflag [#allocation3], %s1218
        %s1220 = sand.u32 %s181, 1
        %s1221 = smul.addr %s1220, 256
        %s1222 = scalar_lea.vmem [#allocation2], %s1221
        // Predicated region
        $region49: #{tpu_custom_call.1} parent=47 // pred_check
          %p1223 = pneg %p191
        $region50: #{tpu_custom_call.1} parent=47 // pred_check_branch
          %1225 = sbr.rel (%p1223) target = $region52
        $region51: #{tpu_custom_call.1} parent=47 // pred_region
          %s1226 = smul.u32 32, %s21
          %s1228 = ssub.s32 4096, 4096
          %1229 = vsyncadd %s1219, %s1228
          %s1230 = smul.addr %s1226, 128
          %s1231 = scalar_lea.hbm %s7, %s1230
          %s1232 = sshll.u32 %s1222, 4
          %s1233 = int_to_ptr.vmem [resolvable:$true] %s1232
          %1238 = dma.vmem_to_hbm [thread:$0]  %s1233, 4096, %s1231, %s1219, 128, 128, 8
        $region52: #{tpu_custom_call.1} parent=47 // pred_fallthru
          _
      $region48: #{tpu_custom_call.1} parent=5 // pred_fallthru
        _
      %p1239 = scmp.le.s32.totalorder 2, %s16
      // Predicated region
      $region53: #{tpu_custom_call.1} parent=5 // pred_check
        %p1240 = pneg %p1239
      $region54: #{tpu_custom_call.1} parent=5 // pred_check_branch
        %1242 = sbr.rel (%p1240) target = $region56
      $region55: #{tpu_custom_call.1} parent=5 // pred_region
        %s1243 = ssub.s32 %s16, 2
        // Predicated region
        $region57: #{tpu_custom_call.1} parent=55 // pred_check
          %p1244 = pneg %p197
        $region58: #{tpu_custom_call.1} parent=55 // pred_check_branch
          %1246 = sbr.rel (%p1244) target = $region60
        $region59: #{tpu_custom_call.1} parent=55 // pred_region
          %s1247 = sand.u32 %s182, 1
          %s1248 = scalar_lea.sflag [#allocation3], %s1247
          %s1249 = sand.u32 %s182, 1
          %s1250 = smul.addr %s1249, 256
          %s1251 = scalar_lea.vmem [#allocation2], %s1250
          %1252 = dma.done %s1248, 4096
        $region60: #{tpu_custom_call.1} parent=55 // pred_fallthru
          _
      $region56: #{tpu_custom_call.1} parent=5 // pred_fallthru
        _
    $region6: #{tpu_custom_call.1} parent=1 // loop_footer
      %s20 = sadd.s32 1, %s16
    $region7: #{tpu_custom_call.1} parent=1 // loop_footer_branch
      %15 = sbr.rel target = $region3
    $region8: #{tpu_custom_call.1} parent=1 // loop_exit
      _
    %1253 = vsyncpa [#allocation3], 1
    %s1254 = scalar_lea.sflag [#allocation3], 1
    %1255 = vsyncpa %s1254, 1

</llo_original>
